<compile_context>
chip_gen: v7x
topology: tpu7x:2x2x1
jax: 0.10.0
libtpu: 0.0.40
codegen_flags: <defaults>
</compile_context>

<pallas_src>
import functools

import numpy as np
import jax
import jax.numpy as jnp
from jax.experimental import pallas as pl
from jax.experimental.pallas import tpu as pltpu


def _fused_relukan_kernel(x_ref, *refs, num_layers):
    """Fused forward over all layers for one batch tile.

    refs layout: per layer l -> (R, plo, phi, w, b); output ref is last.
      R   : (I_in, K)    one-hot repeat matrix, h_rep = h @ R    (K = I_l * G)
      plo : (1, K)       flattened phase_low
      phi : (1, K)       flattened phase_height
      w   : (K, O_pad)   conv weight (r^2 folded in, O zero-padded to 128 lanes)
      b   : (1, O_pad)   conv bias   (zero-padded)
    """
    o_ref = refs[-1]
    h = x_ref[...]                                               # (TB, I0) f32
    for l in range(num_layers):
        r_ref, plo_ref, phi_ref, w_ref, b_ref = refs[5 * l: 5 * l + 5]
        # Lane-dense expansion of each input channel across its G basis slots.
        h_rep = jnp.dot(h, r_ref[...],
                        preferred_element_type=jnp.float32)      # (TB, K)
        x1 = jnp.maximum(h_rep - plo_ref[...], 0.0)
        x2 = jnp.maximum(phi_ref[...] - h_rep, 0.0)
        t = x1 * x2
        basis = t * t                                            # (TB, K); r^2 lives in w
        h = jnp.dot(basis, w_ref[...],
                    preferred_element_type=jnp.float32) + b_ref[...]   # (TB, O_pad)
    o_ref[...] = h


def _repeat_matrix(in_cols, real_in, G):
    """(in_cols, real_in*G) one-hot matrix: col i*G+j picks input channel i."""
    R = np.zeros((in_cols, real_in * G), np.float32)
    for i in range(real_in):
        R[i, i * G:(i + 1) * G] = 1.0
    return jnp.asarray(R)


def init_relukan(width, g, k, key, lane=128):
    """Deterministic parameter init mirroring the PyTorch module's shapes."""
    G = g + k
    layers = []
    for idx in range(len(width) - 1):
        I, O = width[idx], width[idx + 1]
        r = 4.0 * g * g / ((k + 1) * (k + 1))
        phase_low = np.tile((np.arange(-k, g) / g)[None, :], (I, 1)).astype(np.float32)
        phase_high = (phase_low + (k + 1) / g).astype(np.float32)

        key, wk, bk = jax.random.split(key, 3)
        fan_in = 1 * G * I                       # Conv2d(1, O, (g+k, I)) fan-in
        bound = float(1.0 / np.sqrt(fan_in))     # PyTorch-style uniform bound
        W = jax.random.uniform(wk, (O, 1, G, I), jnp.float32, -bound, bound)
        b = jax.random.uniform(bk, (O,), jnp.float32, -bound, bound)

        K = I * G
        O_pad = ((O + lane - 1) // lane) * lane
        # conv flat index f = h*I + w ; basis flat index f = i*G + j  -> identical
        w_flat = jnp.asarray(W).reshape(O, K).T * (r * r)        # (K, O), r^2 folded
        w_pad = jnp.zeros((K, O_pad), jnp.float32).at[:, :O].set(w_flat)
        b_pad = jnp.zeros((1, O_pad), jnp.float32).at[0, :O].set(jnp.asarray(b))

        layers.append(dict(
            I=I, O=O, O_pad=O_pad, K=K,
            plo_flat=jnp.asarray(phase_low.reshape(1, K)),
            phi_flat=jnp.asarray(phase_high.reshape(1, K)),
            w_pad=w_pad, b_pad=b_pad,
            # originals, kept only for the pure-JAX reference check
            W=jnp.asarray(W), bias=jnp.asarray(b), r=float(r),
            phase_low=jnp.asarray(phase_low), phase_high=jnp.asarray(phase_high),
        ))
    return layers


def relukan_forward(x, layers, g, k, *, batch_tile=8):
    """Full ReLUKAN stack. x: (B, width[0], 1) -> (B, width[-1], 1)."""
    G = g + k
    h0 = x[:, :, 0].astype(jnp.float32)          # (B, I0)
    B, I0 = h0.shape

    bt = max(8, batch_tile)                      # sublane-aligned batch tile
    Bp = ((B + bt - 1) // bt) * bt
    if Bp != B:
        h0 = jnp.concatenate([h0, jnp.zeros((Bp - B, I0), jnp.float32)], axis=0)

    ops = []
    in_specs = [pl.BlockSpec((bt, I0), lambda b: (b, 0))]
    in_cols = I0
    for p in layers:
        R = _repeat_matrix(in_cols, p["I"], G)
        for a in (R, p["plo_flat"], p["phi_flat"], p["w_pad"], p["b_pad"]):
            ops.append(a)
            in_specs.append(pl.BlockSpec(a.shape, lambda b: (0, 0)))
        in_cols = p["O_pad"]

    O_last, O_pad_last = layers[-1]["O"], layers[-1]["O_pad"]
    kernel = functools.partial(_fused_relukan_kernel, num_layers=len(layers))

    out = pl.pallas_call(
        kernel,
        out_shape=jax.ShapeDtypeStruct((Bp, O_pad_last), jnp.float32),
        grid=(Bp // bt,),
        in_specs=in_specs,
        out_specs=pl.BlockSpec((bt, O_pad_last), lambda b: (b, 0)),
        compiler_params=pltpu.CompilerParams(
            dimension_semantics=("parallel",)),
    )(h0, *ops)

    return out[:B, :O_last, None]                # strip batch/lane padding


def relukan_reference(x, layers, g, k):
    """Pure-JAX replica of the PyTorch forward (for verification)."""
    G = g + k
    h = x                                        # (B, I, 1)
    for p in layers:
        W, b, r = p["W"], p["bias"], p["r"]
        plo, phi = p["phase_low"], p["phase_high"]
        B = h.shape[0]
        I = plo.shape[0]
        O = W.shape[0]
        x1 = jnp.maximum(h - plo, 0.0)           # (B, I, G)
        x2 = jnp.maximum(phi - h, 0.0)
        y = x1 * x2 * r
        y = y * y
        y = y.reshape(B, 1, G, I)                # flat C-order reshape, as in torch
        out = jnp.einsum("bchw,ochw->bo", y, W,
                         precision=jax.lax.Precision.HIGHEST) + b
        h = out.reshape(B, O, 1)
    return h


if __name__ == "__main__":
    key = jax.random.PRNGKey(0)
    width = [4, 8, 4]
    g, k = 5, 3
    batch = 16

    key, xk = jax.random.split(key)
    x = jax.random.uniform(xk, (batch, width[0], 1), jnp.float32)

    layers = init_relukan(width, g, k, key)

    out = jax.block_until_ready(relukan_forward(x, layers, g, k))
    ref = relukan_reference(x, layers, g, k)
    np.testing.assert_allclose(np.asarray(out), np.asarray(ref), rtol=2e-5, atol=2e-5)
    assert out.shape == (batch, width[-1], 1)
    print("KERNEL_OK")
</pallas_src>

<mosaic_0001>
module attributes {stable_mosaic.version = 11 : i64} {
  func.func @_fused_relukan_kernel(%arg0: i32, %arg1: memref<8x4xf32, #tpu.memory_space<vmem>>, %arg2: memref<4x32xf32, #tpu.memory_space<vmem>>, %arg3: memref<1x32xf32, #tpu.memory_space<vmem>>, %arg4: memref<1x32xf32, #tpu.memory_space<vmem>>, %arg5: memref<32x128xf32, #tpu.memory_space<vmem>>, %arg6: memref<1x128xf32, #tpu.memory_space<vmem>>, %arg7: memref<128x64xf32, #tpu.memory_space<vmem>>, %arg8: memref<1x64xf32, #tpu.memory_space<vmem>>, %arg9: memref<1x64xf32, #tpu.memory_space<vmem>>, %arg10: memref<64x128xf32, #tpu.memory_space<vmem>>, %arg11: memref<1x128xf32, #tpu.memory_space<vmem>>, %arg12: memref<8x128xf32, #tpu.memory_space<vmem>>) attributes {dimension_semantics = [#tpu.dimension_semantics<parallel>], iteration_bounds = array<i64: 2>, scalar_prefetch = 0 : i64, scratch_operands = 0 : i64, tpu.core_type = #tpu.core_type<tc>, window_params = [{transform_indices = @transform_0, window_bounds = array<i64: 8, 4>}, {pipeline_mode = #tpu.pipeline_mode<synchronous>, transform_indices = @transform_1, window_bounds = array<i64: 4, 32>}, {pipeline_mode = #tpu.pipeline_mode<synchronous>, transform_indices = @transform_2, window_bounds = array<i64: 1, 32>}, {pipeline_mode = #tpu.pipeline_mode<synchronous>, transform_indices = @transform_3, window_bounds = array<i64: 1, 32>}, {pipeline_mode = #tpu.pipeline_mode<synchronous>, transform_indices = @transform_4, window_bounds = array<i64: 32, 128>}, {pipeline_mode = #tpu.pipeline_mode<synchronous>, transform_indices = @transform_5, window_bounds = array<i64: 1, 128>}, {pipeline_mode = #tpu.pipeline_mode<synchronous>, transform_indices = @transform_6, window_bounds = array<i64: 128, 64>}, {pipeline_mode = #tpu.pipeline_mode<synchronous>, transform_indices = @transform_7, window_bounds = array<i64: 1, 64>}, {pipeline_mode = #tpu.pipeline_mode<synchronous>, transform_indices = @transform_8, window_bounds = array<i64: 1, 64>}, {pipeline_mode = #tpu.pipeline_mode<synchronous>, transform_indices = @transform_9, window_bounds = array<i64: 64, 128>}, {pipeline_mode = #tpu.pipeline_mode<synchronous>, transform_indices = @transform_10, window_bounds = array<i64: 1, 128>}, {transform_indices = @transform_11, window_bounds = array<i64: 8, 128>}]} {
    %c0 = arith.constant 0 : index
    %c0_0 = arith.constant 0 : index
    %0 = vector.load %arg1[%c0, %c0_0] : memref<8x4xf32, #tpu.memory_space<vmem>>, vector<8x4xf32>
    %c0_1 = arith.constant 0 : index
    %c0_2 = arith.constant 0 : index
    %1 = vector.load %arg2[%c0_1, %c0_2] : memref<4x32xf32, #tpu.memory_space<vmem>>, vector<4x32xf32>
    %cst = arith.constant dense<0.000000e+00> : vector<8x32xf32>
    %2 = tpu.matmul %0, %1, %cst {dimension_numbers = #tpu.dot_dimension_numbers<[1], [0], [0], [1], [0, 0, 1, 1], [], []>} : vector<8x4xf32>, vector<4x32xf32>, vector<8x32xf32> -> vector<8x32xf32>
    %c0_3 = arith.constant 0 : index
    %c0_4 = arith.constant 0 : index
    %3 = vector.load %arg3[%c0_3, %c0_4] : memref<1x32xf32, #tpu.memory_space<vmem>>, vector<1x32xf32>
    %4 = vector.broadcast %3 : vector<1x32xf32> to vector<8x32xf32>
    %5 = arith.subf %2, %4 : vector<8x32xf32>
    %cst_5 = arith.constant 0.000000e+00 : f32
    %6 = vector.broadcast %cst_5 : f32 to vector<8x32xf32>
    %7 = arith.maximumf %5, %6 : vector<8x32xf32>
    %c0_6 = arith.constant 0 : index
    %c0_7 = arith.constant 0 : index
    %8 = vector.load %arg4[%c0_6, %c0_7] : memref<1x32xf32, #tpu.memory_space<vmem>>, vector<1x32xf32>
    %9 = vector.broadcast %8 : vector<1x32xf32> to vector<8x32xf32>
    %10 = arith.subf %9, %2 : vector<8x32xf32>
    %cst_8 = arith.constant 0.000000e+00 : f32
    %11 = vector.broadcast %cst_8 : f32 to vector<8x32xf32>
    %12 = arith.maximumf %10, %11 : vector<8x32xf32>
    %13 = arith.mulf %7, %12 : vector<8x32xf32>
    %14 = arith.mulf %13, %13 : vector<8x32xf32>
    %c0_9 = arith.constant 0 : index
    %c0_10 = arith.constant 0 : index
    %15 = vector.load %arg5[%c0_9, %c0_10] : memref<32x128xf32, #tpu.memory_space<vmem>>, vector<32x128xf32>
    %cst_11 = arith.constant dense<0.000000e+00> : vector<8x128xf32>
    %16 = tpu.matmul %14, %15, %cst_11 {dimension_numbers = #tpu.dot_dimension_numbers<[1], [0], [0], [1], [0, 0, 1, 1], [], []>} : vector<8x32xf32>, vector<32x128xf32>, vector<8x128xf32> -> vector<8x128xf32>
    %c0_12 = arith.constant 0 : index
    %c0_13 = arith.constant 0 : index
    %17 = vector.load %arg6[%c0_12, %c0_13] : memref<1x128xf32, #tpu.memory_space<vmem>>, vector<1x128xf32>
    %18 = vector.broadcast %17 : vector<1x128xf32> to vector<8x128xf32>
    %19 = arith.addf %16, %18 : vector<8x128xf32>
    %c0_14 = arith.constant 0 : index
    %c0_15 = arith.constant 0 : index
    %20 = vector.load %arg7[%c0_14, %c0_15] : memref<128x64xf32, #tpu.memory_space<vmem>>, vector<128x64xf32>
    %cst_16 = arith.constant dense<0.000000e+00> : vector<8x64xf32>
    %21 = tpu.matmul %19, %20, %cst_16 {dimension_numbers = #tpu.dot_dimension_numbers<[1], [0], [0], [1], [0, 0, 1, 1], [], []>} : vector<8x128xf32>, vector<128x64xf32>, vector<8x64xf32> -> vector<8x64xf32>
    %c0_17 = arith.constant 0 : index
    %c0_18 = arith.constant 0 : index
    %22 = vector.load %arg8[%c0_17, %c0_18] : memref<1x64xf32, #tpu.memory_space<vmem>>, vector<1x64xf32>
    %23 = vector.broadcast %22 : vector<1x64xf32> to vector<8x64xf32>
    %24 = arith.subf %21, %23 : vector<8x64xf32>
    %cst_19 = arith.constant 0.000000e+00 : f32
    %25 = vector.broadcast %cst_19 : f32 to vector<8x64xf32>
    %26 = arith.maximumf %24, %25 : vector<8x64xf32>
    %c0_20 = arith.constant 0 : index
    %c0_21 = arith.constant 0 : index
    %27 = vector.load %arg9[%c0_20, %c0_21] : memref<1x64xf32, #tpu.memory_space<vmem>>, vector<1x64xf32>
    %28 = vector.broadcast %27 : vector<1x64xf32> to vector<8x64xf32>
    %29 = arith.subf %28, %21 : vector<8x64xf32>
    %cst_22 = arith.constant 0.000000e+00 : f32
    %30 = vector.broadcast %cst_22 : f32 to vector<8x64xf32>
    %31 = arith.maximumf %29, %30 : vector<8x64xf32>
    %32 = arith.mulf %26, %31 : vector<8x64xf32>
    %33 = arith.mulf %32, %32 : vector<8x64xf32>
    %c0_23 = arith.constant 0 : index
    %c0_24 = arith.constant 0 : index
    %34 = vector.load %arg10[%c0_23, %c0_24] : memref<64x128xf32, #tpu.memory_space<vmem>>, vector<64x128xf32>
    %cst_25 = arith.constant dense<0.000000e+00> : vector<8x128xf32>
    %35 = tpu.matmul %33, %34, %cst_25 {dimension_numbers = #tpu.dot_dimension_numbers<[1], [0], [0], [1], [0, 0, 1, 1], [], []>} : vector<8x64xf32>, vector<64x128xf32>, vector<8x128xf32> -> vector<8x128xf32>
    %c0_26 = arith.constant 0 : index
    %c0_27 = arith.constant 0 : index
    %36 = vector.load %arg11[%c0_26, %c0_27] : memref<1x128xf32, #tpu.memory_space<vmem>>, vector<1x128xf32>
    %37 = vector.broadcast %36 : vector<1x128xf32> to vector<8x128xf32>
    %38 = arith.addf %35, %37 : vector<8x128xf32>
    %c0_28 = arith.constant 0 : index
    %c0_29 = arith.constant 0 : index
    %39 = vector.load %arg12[%c0_28, %c0_29] : memref<8x128xf32, #tpu.memory_space<vmem>>, vector<8x128xf32>
    tpu.vector_store %arg12[%c0_28, %c0_29], %38 {strides = array<i32>} : memref<8x128xf32, #tpu.memory_space<vmem>>, vector<8x128xf32>,
    return
  }
  func.func @transform_0(%arg0: i32) -> (i32, i32) {
    %c0_i32 = arith.constant 0 : i32
    %c0_i32_0 = arith.constant 0 : i32
    return %arg0, %c0_i32 : i32, i32
  }
  func.func @transform_1(%arg0: i32) -> (i32, i32) {
    %c0_i32 = arith.constant 0 : i32
    %c0_i32_0 = arith.constant 0 : i32
    %c0_i32_1 = arith.constant 0 : i32
    return %c0_i32, %c0_i32_0 : i32, i32
  }
  func.func @transform_2(%arg0: i32) -> (i32, i32) {
    %c0_i32 = arith.constant 0 : i32
    %c0_i32_0 = arith.constant 0 : i32
    %c0_i32_1 = arith.constant 0 : i32
    return %c0_i32, %c0_i32_0 : i32, i32
  }
  func.func @transform_3(%arg0: i32) -> (i32, i32) {
    %c0_i32 = arith.constant 0 : i32
    %c0_i32_0 = arith.constant 0 : i32
    %c0_i32_1 = arith.constant 0 : i32
    return %c0_i32, %c0_i32_0 : i32, i32
  }
  func.func @transform_4(%arg0: i32) -> (i32, i32) {
    %c0_i32 = arith.constant 0 : i32
    %c0_i32_0 = arith.constant 0 : i32
    %c0_i32_1 = arith.constant 0 : i32
    return %c0_i32, %c0_i32_0 : i32, i32
  }
  func.func @transform_5(%arg0: i32) -> (i32, i32) {
    %c0_i32 = arith.constant 0 : i32
    %c0_i32_0 = arith.constant 0 : i32
    %c0_i32_1 = arith.constant 0 : i32
    return %c0_i32, %c0_i32_0 : i32, i32
  }
  func.func @transform_6(%arg0: i32) -> (i32, i32) {
    %c0_i32 = arith.constant 0 : i32
    %c0_i32_0 = arith.constant 0 : i32
    %c0_i32_1 = arith.constant 0 : i32
    return %c0_i32, %c0_i32_0 : i32, i32
  }
  func.func @transform_7(%arg0: i32) -> (i32, i32) {
    %c0_i32 = arith.constant 0 : i32
    %c0_i32_0 = arith.constant 0 : i32
    %c0_i32_1 = arith.constant 0 : i32
    return %c0_i32, %c0_i32_0 : i32, i32
  }
  func.func @transform_8(%arg0: i32) -> (i32, i32) {
    %c0_i32 = arith.constant 0 : i32
    %c0_i32_0 = arith.constant 0 : i32
    %c0_i32_1 = arith.constant 0 : i32
    return %c0_i32, %c0_i32_0 : i32, i32
  }
  func.func @transform_9(%arg0: i32) -> (i32, i32) {
    %c0_i32 = arith.constant 0 : i32
    %c0_i32_0 = arith.constant 0 : i32
    %c0_i32_1 = arith.constant 0 : i32
    return %c0_i32, %c0_i32_0 : i32, i32
  }
  func.func @transform_10(%arg0: i32) -> (i32, i32) {
    %c0_i32 = arith.constant 0 : i32
    %c0_i32_0 = arith.constant 0 : i32
    %c0_i32_1 = arith.constant 0 : i32
    return %c0_i32, %c0_i32_0 : i32, i32
  }
  func.func @transform_11(%arg0: i32) -> (i32, i32) {
    %c0_i32 = arith.constant 0 : i32
    %c0_i32_0 = arith.constant 0 : i32
    return %arg0, %c0_i32 : i32, i32
  }
}

</mosaic_0001>

<llo_original>
// kernel: tpu_custom_call.1
$region0: #{tpu_custom_call.1}
  #allocation0 [shape = 'u32[]', space=smem, size = 0x4, offset = 0x4, fixed_abs, tag = 'smem constant byte address 0x4 - core index']
  #allocation1 [shape = 'u32[144,128]{1,0:T(1,128)}', space=vmem, size = 0x12000, scoped, tag = 'internal scratch']
  %s0 = inlined_call_operand.vmem [shape: f32[16,4], index: 0, kind: input, shape index: {}]
  %s1 = inlined_call_operand.vmem [shape: f32[4,32], index: 1, kind: input, shape index: {}]
  %s2 = inlined_call_operand.vmem [shape: f32[1,32], index: 2, kind: input, shape index: {}]
  %s3 = inlined_call_operand.vmem [shape: f32[1,32], index: 3, kind: input, shape index: {}]
  %s4 = inlined_call_operand.vmem [shape: f32[32,128], index: 4, kind: input, shape index: {}]
  %s5 = inlined_call_operand.vmem [shape: f32[1,128], index: 5, kind: input, shape index: {}]
  %s6 = inlined_call_operand.vmem [shape: f32[128,64], index: 6, kind: input, shape index: {}]
  %s7 = inlined_call_operand.vmem [shape: f32[1,64], index: 7, kind: input, shape index: {}]
  %s8 = inlined_call_operand.vmem [shape: f32[1,64], index: 8, kind: input, shape index: {}]
  %s9 = inlined_call_operand.vmem [shape: f32[64,128], index: 9, kind: input, shape index: {}]
  %s10 = inlined_call_operand.vmem [shape: f32[1,128], index: 10, kind: input, shape index: {}]
  %s11 = inlined_call_operand.hbm [shape: f32[16,128], index: 11, kind: output, shape index: {}]
  %s12 = sld [smem:[#allocation0]]
  $region77: #{tpu_custom_call.1} parent=0
    _
  %s14 = ssub.s32 1, %s12
  %s15 = scalar_select 0, %s14, %s12
  $region1: #{tpu_custom_call.1} parent=0
    #allocation2 [shape = 'u8[8192]{0}', space=vmem, size = 0x2000, scoped, tag = 'output window, operand 0']
    #allocation3 [shape = 's32[2]{0}', space=sflag, size = 0x8, scoped, tag = 'scoped memory for tpu_custom_call.1']
    %16 = vsyncpa [#allocation3], 0
    %s17 = scalar_lea.sflag [#allocation3], 1
    %18 = vsyncpa %s17, 0
    loop: start=0, step=1, limit=4
    $region2: #{tpu_custom_call.1} parent=1 // loop_pre_header
      _
    $region3: #{tpu_custom_call.1} parent=1 // loop_header
      %s20 = sphi 0, %s24
      %p21 = scmp.ge.s32.totalorder %s20, 4
      %s30 = sphi 0, %s32
      %s33 = sphi 0, %s30
      %s34 = sphi 0, %s33
      %s50 = sphi 0, %s34
      %s54 = sphi 0, %s54
      %s56 = sphi 0, %s54
      %s57 = sphi 0, %s56
      %s71 = sphi 0, %s57
      %s75 = sphi 0, %s75
      %s77 = sphi 0, %s75
      %s78 = sphi 0, %s77
      %s92 = sphi 0, %s78
      %s96 = sphi 0, %s96
      %s98 = sphi 0, %s96
      %s99 = sphi 0, %s98
      %s113 = sphi 0, %s99
      %s117 = sphi 0, %s117
      %s119 = sphi 0, %s117
      %s120 = sphi 0, %s119
      %s134 = sphi 0, %s120
      %s138 = sphi 0, %s138
      %s140 = sphi 0, %s138
      %s141 = sphi 0, %s140
      %s155 = sphi 0, %s141
      %s159 = sphi 0, %s159
      %s161 = sphi 0, %s159
      %s162 = sphi 0, %s161
      %s176 = sphi 0, %s162
      %s180 = sphi 0, %s180
      %s182 = sphi 0, %s180
      %s183 = sphi 0, %s182
      %s197 = sphi 0, %s183
      %s201 = sphi 0, %s201
      %s203 = sphi 0, %s201
      %s204 = sphi 0, %s203
      %s218 = sphi 0, %s204
      %s222 = sphi 0, %s222
      %s224 = sphi 0, %s222
      %s225 = sphi 0, %s224
      %s239 = sphi 0, %s225
      %s243 = sphi 0, %s243
      %s245 = sphi 0, %s243
      %s246 = sphi 0, %s245
      %s260 = sphi 0, %s246
      %s266 = sphi 0, %s268
      %s269 = sphi 0, %s266
      %s270 = sphi 0, %s269
      %s286 = sphi 0, %s270
    $region4: #{tpu_custom_call.1} parent=1 // loop_header_branch
      %23 = sbr.rel (%p21) target = $region8
    $region5: #{tpu_custom_call.1} parent=1 // loop_body
      %s25 = ssub.s32 %s20, 1
      %s26 = ssub.s32 %s20, 2
      %s27 = sadd.s32 %s20, 1
      %s28 = ssub.s32 %s20, %s27
      %p29 = scmp.eq.s32.totalorder %s28, 0
      %s31 = sadd.s32 %s30, 1
      %s32 = scalar_select %p29, %s30, %s31
      %p35 = pneg %p29
      %p36 = scmp.eq.s32.totalorder %s20, 1
      %p37 = por %p35, %p36
      %p38 = scmp.ne.s32.totalorder %s30, %s33
      %p39 = scmp.eq.s32.totalorder %s20, 0
      %p40 = por %p38, %p39
      %p41 = scmp.ne.s32.totalorder %s30, %s33
      %p42 = scmp.eq.s32.totalorder %s25, 1
      %p43 = por %p41, %p42
      %p44 = scmp.ne.s32.totalorder %s33, %s34
      %p45 = scmp.eq.s32.totalorder %s25, 0
      %p46 = por %p44, %p45
      %p47 = scmp.ne.s32.totalorder %s33, %s34
      %p48 = scmp.eq.s32.totalorder %s26, 1
      %p49 = por %p47, %p48
      %p51 = scmp.ne.s32.totalorder %s34, %s50
      %p52 = scmp.eq.s32.totalorder %s26, 0
      %p53 = por %p51, %p52
      %s55 = sadd.s32 %s54, 1
      %p58 = scmp.eq.s32.totalorder %s20, 1
      %p59 = scmp.ne.s32.totalorder %s54, %s56
      %p60 = scmp.eq.s32.totalorder %s20, 0
      %p61 = por %p59, %p60
      %p62 = scmp.ne.s32.totalorder %s54, %s56
      %p63 = scmp.eq.s32.totalorder %s25, 1
      %p64 = por %p62, %p63
      %p65 = scmp.ne.s32.totalorder %s56, %s57
      %p66 = scmp.eq.s32.totalorder %s25, 0
      %p67 = por %p65, %p66
      %p68 = scmp.ne.s32.totalorder %s56, %s57
      %p69 = scmp.eq.s32.totalorder %s26, 1
      %p70 = por %p68, %p69
      %p72 = scmp.ne.s32.totalorder %s57, %s71
      %p73 = scmp.eq.s32.totalorder %s26, 0
      %p74 = por %p72, %p73
      %s76 = sadd.s32 %s75, 1
      %p79 = scmp.eq.s32.totalorder %s20, 1
      %p80 = scmp.ne.s32.totalorder %s75, %s77
      %p81 = scmp.eq.s32.totalorder %s20, 0
      %p82 = por %p80, %p81
      %p83 = scmp.ne.s32.totalorder %s75, %s77
      %p84 = scmp.eq.s32.totalorder %s25, 1
      %p85 = por %p83, %p84
      %p86 = scmp.ne.s32.totalorder %s77, %s78
      %p87 = scmp.eq.s32.totalorder %s25, 0
      %p88 = por %p86, %p87
      %p89 = scmp.ne.s32.totalorder %s77, %s78
      %p90 = scmp.eq.s32.totalorder %s26, 1
      %p91 = por %p89, %p90
      %p93 = scmp.ne.s32.totalorder %s78, %s92
      %p94 = scmp.eq.s32.totalorder %s26, 0
      %p95 = por %p93, %p94
      %s97 = sadd.s32 %s96, 1
      %p100 = scmp.eq.s32.totalorder %s20, 1
      %p101 = scmp.ne.s32.totalorder %s96, %s98
      %p102 = scmp.eq.s32.totalorder %s20, 0
      %p103 = por %p101, %p102
      %p104 = scmp.ne.s32.totalorder %s96, %s98
      %p105 = scmp.eq.s32.totalorder %s25, 1
      %p106 = por %p104, %p105
      %p107 = scmp.ne.s32.totalorder %s98, %s99
      %p108 = scmp.eq.s32.totalorder %s25, 0
      %p109 = por %p107, %p108
      %p110 = scmp.ne.s32.totalorder %s98, %s99
      %p111 = scmp.eq.s32.totalorder %s26, 1
      %p112 = por %p110, %p111
      %p114 = scmp.ne.s32.totalorder %s99, %s113
      %p115 = scmp.eq.s32.totalorder %s26, 0
      %p116 = por %p114, %p115
      %s118 = sadd.s32 %s117, 1
      %p121 = scmp.eq.s32.totalorder %s20, 1
      %p122 = scmp.ne.s32.totalorder %s117, %s119
      %p123 = scmp.eq.s32.totalorder %s20, 0
      %p124 = por %p122, %p123
      %p125 = scmp.ne.s32.totalorder %s117, %s119
      %p126 = scmp.eq.s32.totalorder %s25, 1
      %p127 = por %p125, %p126
      %p128 = scmp.ne.s32.totalorder %s119, %s120
      %p129 = scmp.eq.s32.totalorder %s25, 0
      %p130 = por %p128, %p129
      %p131 = scmp.ne.s32.totalorder %s119, %s120
      %p132 = scmp.eq.s32.totalorder %s26, 1
      %p133 = por %p131, %p132
      %p135 = scmp.ne.s32.totalorder %s120, %s134
      %p136 = scmp.eq.s32.totalorder %s26, 0
      %p137 = por %p135, %p136
      %s139 = sadd.s32 %s138, 1
      %p142 = scmp.eq.s32.totalorder %s20, 1
      %p143 = scmp.ne.s32.totalorder %s138, %s140
      %p144 = scmp.eq.s32.totalorder %s20, 0
      %p145 = por %p143, %p144
      %p146 = scmp.ne.s32.totalorder %s138, %s140
      %p147 = scmp.eq.s32.totalorder %s25, 1
      %p148 = por %p146, %p147
      %p149 = scmp.ne.s32.totalorder %s140, %s141
      %p150 = scmp.eq.s32.totalorder %s25, 0
      %p151 = por %p149, %p150
      %p152 = scmp.ne.s32.totalorder %s140, %s141
      %p153 = scmp.eq.s32.totalorder %s26, 1
      %p154 = por %p152, %p153
      %p156 = scmp.ne.s32.totalorder %s141, %s155
      %p157 = scmp.eq.s32.totalorder %s26, 0
      %p158 = por %p156, %p157
      %s160 = sadd.s32 %s159, 1
      %p163 = scmp.eq.s32.totalorder %s20, 1
      %p164 = scmp.ne.s32.totalorder %s159, %s161
      %p165 = scmp.eq.s32.totalorder %s20, 0
      %p166 = por %p164, %p165
      %p167 = scmp.ne.s32.totalorder %s159, %s161
      %p168 = scmp.eq.s32.totalorder %s25, 1
      %p169 = por %p167, %p168
      %p170 = scmp.ne.s32.totalorder %s161, %s162
      %p171 = scmp.eq.s32.totalorder %s25, 0
      %p172 = por %p170, %p171
      %p173 = scmp.ne.s32.totalorder %s161, %s162
      %p174 = scmp.eq.s32.totalorder %s26, 1
      %p175 = por %p173, %p174
      %p177 = scmp.ne.s32.totalorder %s162, %s176
      %p178 = scmp.eq.s32.totalorder %s26, 0
      %p179 = por %p177, %p178
      %s181 = sadd.s32 %s180, 1
      %p184 = scmp.eq.s32.totalorder %s20, 1
      %p185 = scmp.ne.s32.totalorder %s180, %s182
      %p186 = scmp.eq.s32.totalorder %s20, 0
      %p187 = por %p185, %p186
      %p188 = scmp.ne.s32.totalorder %s180, %s182
      %p189 = scmp.eq.s32.totalorder %s25, 1
      %p190 = por %p188, %p189
      %p191 = scmp.ne.s32.totalorder %s182, %s183
      %p192 = scmp.eq.s32.totalorder %s25, 0
      %p193 = por %p191, %p192
      %p194 = scmp.ne.s32.totalorder %s182, %s183
      %p195 = scmp.eq.s32.totalorder %s26, 1
      %p196 = por %p194, %p195
      %p198 = scmp.ne.s32.totalorder %s183, %s197
      %p199 = scmp.eq.s32.totalorder %s26, 0
      %p200 = por %p198, %p199
      %s202 = sadd.s32 %s201, 1
      %p205 = scmp.eq.s32.totalorder %s20, 1
      %p206 = scmp.ne.s32.totalorder %s201, %s203
      %p207 = scmp.eq.s32.totalorder %s20, 0
      %p208 = por %p206, %p207
      %p209 = scmp.ne.s32.totalorder %s201, %s203
      %p210 = scmp.eq.s32.totalorder %s25, 1
      %p211 = por %p209, %p210
      %p212 = scmp.ne.s32.totalorder %s203, %s204
      %p213 = scmp.eq.s32.totalorder %s25, 0
      %p214 = por %p212, %p213
      %p215 = scmp.ne.s32.totalorder %s203, %s204
      %p216 = scmp.eq.s32.totalorder %s26, 1
      %p217 = por %p215, %p216
      %p219 = scmp.ne.s32.totalorder %s204, %s218
      %p220 = scmp.eq.s32.totalorder %s26, 0
      %p221 = por %p219, %p220
      %s223 = sadd.s32 %s222, 1
      %p226 = scmp.eq.s32.totalorder %s20, 1
      %p227 = scmp.ne.s32.totalorder %s222, %s224
      %p228 = scmp.eq.s32.totalorder %s20, 0
      %p229 = por %p227, %p228
      %p230 = scmp.ne.s32.totalorder %s222, %s224
      %p231 = scmp.eq.s32.totalorder %s25, 1
      %p232 = por %p230, %p231
      %p233 = scmp.ne.s32.totalorder %s224, %s225
      %p234 = scmp.eq.s32.totalorder %s25, 0
      %p235 = por %p233, %p234
      %p236 = scmp.ne.s32.totalorder %s224, %s225
      %p237 = scmp.eq.s32.totalorder %s26, 1
      %p238 = por %p236, %p237
      %p240 = scmp.ne.s32.totalorder %s225, %s239
      %p241 = scmp.eq.s32.totalorder %s26, 0
      %p242 = por %p240, %p241
      %s244 = sadd.s32 %s243, 1
      %p247 = scmp.eq.s32.totalorder %s20, 1
      %p248 = scmp.ne.s32.totalorder %s243, %s245
      %p249 = scmp.eq.s32.totalorder %s20, 0
      %p250 = por %p248, %p249
      %p251 = scmp.ne.s32.totalorder %s243, %s245
      %p252 = scmp.eq.s32.totalorder %s25, 1
      %p253 = por %p251, %p252
      %p254 = scmp.ne.s32.totalorder %s245, %s246
      %p255 = scmp.eq.s32.totalorder %s25, 0
      %p256 = por %p254, %p255
      %p257 = scmp.ne.s32.totalorder %s245, %s246
      %p258 = scmp.eq.s32.totalorder %s26, 1
      %p259 = por %p257, %p258
      %p261 = scmp.ne.s32.totalorder %s246, %s260
      %p262 = scmp.eq.s32.totalorder %s26, 0
      %p263 = por %p261, %p262
      %s264 = ssub.s32 %s20, %s27
      %p265 = scmp.eq.s32.totalorder %s264, 0
      %s267 = sadd.s32 %s266, 1
      %s268 = scalar_select %p265, %s266, %s267
      %p271 = pneg %p265
      %p272 = scmp.eq.s32.totalorder %s20, 1
      %p273 = por %p271, %p272
      %p274 = scmp.ne.s32.totalorder %s266, %s269
      %p275 = scmp.eq.s32.totalorder %s20, 0
      %p276 = por %p274, %p275
      %p277 = scmp.ne.s32.totalorder %s266, %s269
      %p278 = scmp.eq.s32.totalorder %s25, 1
      %p279 = por %p277, %p278
      %p280 = scmp.ne.s32.totalorder %s269, %s270
      %p281 = scmp.eq.s32.totalorder %s25, 0
      %p282 = por %p280, %p281
      %p283 = scmp.ne.s32.totalorder %s269, %s270
      %p284 = scmp.eq.s32.totalorder %s26, 1
      %p285 = por %p283, %p284
      %p287 = scmp.ne.s32.totalorder %s270, %s286
      %p288 = scmp.eq.s32.totalorder %s26, 0
      %p289 = por %p287, %p288
      %p290 = scmp.le.s32.totalorder 1, %s20
      %p291 = scmp.lt.s32.totalorder %s20, 3
      %p292 = pnand %p290, %p291
      %p293 = pneg %p292
      // Predicated region
      $region9: #{tpu_custom_call.1} parent=5 // pred_check
        _
      $region10: #{tpu_custom_call.1} parent=5 // pred_check_branch
        %295 = sbr.rel (%p292) target = $region12
      $region11: #{tpu_custom_call.1} parent=5 // pred_region
        %s296 = ssub.s32 %s20, 1
        // Predicated region
        $region13: #{tpu_custom_call.1} parent=11 // pred_check
          %p297 = pneg %p67
        $region14: #{tpu_custom_call.1} parent=11 // pred_check_branch
          %299 = sbr.rel (%p297) target = $region16
        $region15: #{tpu_custom_call.1} parent=11 // pred_region
          _
        $region16: #{tpu_custom_call.1} parent=11 // pred_fallthru
          _
        // Predicated region
        $region17: #{tpu_custom_call.1} parent=11 // pred_check
          %p300 = pneg %p88
        $region18: #{tpu_custom_call.1} parent=11 // pred_check_branch
          %302 = sbr.rel (%p300) target = $region20
        $region19: #{tpu_custom_call.1} parent=11 // pred_region
          _
        $region20: #{tpu_custom_call.1} parent=11 // pred_fallthru
          _
        // Predicated region
        $region21: #{tpu_custom_call.1} parent=11 // pred_check
          %p303 = pneg %p109
        $region22: #{tpu_custom_call.1} parent=11 // pred_check_branch
          %305 = sbr.rel (%p303) target = $region24
        $region23: #{tpu_custom_call.1} parent=11 // pred_region
          _
        $region24: #{tpu_custom_call.1} parent=11 // pred_fallthru
          _
        // Predicated region
        $region25: #{tpu_custom_call.1} parent=11 // pred_check
          %p306 = pneg %p130
        $region26: #{tpu_custom_call.1} parent=11 // pred_check_branch
          %308 = sbr.rel (%p306) target = $region28
        $region27: #{tpu_custom_call.1} parent=11 // pred_region
          _
        $region28: #{tpu_custom_call.1} parent=11 // pred_fallthru
          _
        // Predicated region
        $region29: #{tpu_custom_call.1} parent=11 // pred_check
          %p309 = pneg %p151
        $region30: #{tpu_custom_call.1} parent=11 // pred_check_branch
          %311 = sbr.rel (%p309) target = $region32
        $region31: #{tpu_custom_call.1} parent=11 // pred_region
          _
        $region32: #{tpu_custom_call.1} parent=11 // pred_fallthru
          _
        // Predicated region
        $region33: #{tpu_custom_call.1} parent=11 // pred_check
          %p312 = pneg %p172
        $region34: #{tpu_custom_call.1} parent=11 // pred_check_branch
          %314 = sbr.rel (%p312) target = $region36
        $region35: #{tpu_custom_call.1} parent=11 // pred_region
          _
        $region36: #{tpu_custom_call.1} parent=11 // pred_fallthru
          _
        // Predicated region
        $region37: #{tpu_custom_call.1} parent=11 // pred_check
          %p315 = pneg %p193
        $region38: #{tpu_custom_call.1} parent=11 // pred_check_branch
          %317 = sbr.rel (%p315) target = $region40
        $region39: #{tpu_custom_call.1} parent=11 // pred_region
          _
        $region40: #{tpu_custom_call.1} parent=11 // pred_fallthru
          _
        // Predicated region
        $region41: #{tpu_custom_call.1} parent=11 // pred_check
          %p318 = pneg %p214
        $region42: #{tpu_custom_call.1} parent=11 // pred_check_branch
          %320 = sbr.rel (%p318) target = $region44
        $region43: #{tpu_custom_call.1} parent=11 // pred_region
          _
        $region44: #{tpu_custom_call.1} parent=11 // pred_fallthru
          _
        // Predicated region
        $region45: #{tpu_custom_call.1} parent=11 // pred_check
          %p321 = pneg %p235
        $region46: #{tpu_custom_call.1} parent=11 // pred_check_branch
          %323 = sbr.rel (%p321) target = $region48
        $region47: #{tpu_custom_call.1} parent=11 // pred_region
          _
        $region48: #{tpu_custom_call.1} parent=11 // pred_fallthru
          _
        // Predicated region
        $region49: #{tpu_custom_call.1} parent=11 // pred_check
          %p324 = pneg %p256
        $region50: #{tpu_custom_call.1} parent=11 // pred_check_branch
          %326 = sbr.rel (%p324) target = $region52
        $region51: #{tpu_custom_call.1} parent=11 // pred_region
          _
        $region52: #{tpu_custom_call.1} parent=11 // pred_fallthru
          _
      $region12: #{tpu_custom_call.1} parent=5 // pred_fallthru
        _
      %p327 = scmp.lt.s32.totalorder %s20, 2
      // Predicated region
      $region53: #{tpu_custom_call.1} parent=5 // pred_check
        %p328 = pneg %p327
      $region54: #{tpu_custom_call.1} parent=5 // pred_check_branch
        %330 = sbr.rel (%p328) target = $region56
      $region55: #{tpu_custom_call.1} parent=5 // pred_region
        // Predicated region
        $region57: #{tpu_custom_call.1} parent=55 // pred_check
          %p331 = pneg %p40
        $region58: #{tpu_custom_call.1} parent=55 // pred_check_branch
          %333 = sbr.rel (%p331) target = $region60
        $region59: #{tpu_custom_call.1} parent=55 // pred_region
          %p334 = scmp.lt.s32.totalorder %s20, 1
          %s335 = scalar_select %p334, %s20, 1
          %s336 = smul.addr %s335, 8
          %s337 = scalar_lea.vmem %s0, %s336
        $region60: #{tpu_custom_call.1} parent=55 // pred_fallthru
          _
      $region56: #{tpu_custom_call.1} parent=5 // pred_fallthru
        _
      %p338 = scmp.le.s32.totalorder 1, %s20
      %p339 = scmp.lt.s32.totalorder %s20, 3
      %p340 = pnand %p338, %p339
      %p341 = pneg %p340
      // Predicated region
      $region61: #{tpu_custom_call.1} parent=5 // pred_check
        _
      $region62: #{tpu_custom_call.1} parent=5 // pred_check_branch
        %343 = sbr.rel (%p340) target = $region64
      $region63: #{tpu_custom_call.1} parent=5 // pred_region
        %s344 = ssub.s32 %s20, 1
        %p345 = scmp.lt.s32.totalorder %s25, 1
        %s346 = scalar_select %p345, %s25, 1
        %s347 = smul.addr %s346, 8
        %s348 = scalar_lea.vmem %s0, %s347
        %p349 = pneg %p46
        %p350 = pneg %p43
        %p351 = pneg %p67
        %p352 = pneg %p64
        %p353 = pneg %p88
        %p354 = pneg %p85
        %p355 = pneg %p109
        %p356 = pneg %p106
        %p357 = pneg %p130
        %p358 = pneg %p127
        %p359 = pneg %p151
        %p360 = pneg %p148
        %p361 = pneg %p172
        %p362 = pneg %p169
        %p363 = pneg %p193
        %p364 = pneg %p190
        %p365 = pneg %p214
        %p366 = pneg %p211
        %p367 = pneg %p235
        %p368 = pneg %p232
        %p369 = pneg %p256
        %p370 = pneg %p253
        %p371 = pneg %p282
        %p372 = pneg %p279
        %s373 = sand.u32 %s269, 1
        %s374 = scalar_lea.sflag [#allocation3], %s373
        %s375 = sand.u32 %s269, 1
        %s376 = smul.addr %s375, 8
        %s377 = scalar_lea.vmem [#allocation2], %s376
        %p378 = scmp.lt.s32.totalorder %s25, 1
        %s379 = scalar_select %p378, %s25, 1
        %s380 = smul.addr %s379, 8
        %s381 = scalar_lea.vmem %s0, %s380
        %v382 = vld [vmem:[%s381] sm:$0xff]
        %v383 = vld [vmem:[%s1] sm:$0xf]
        %vm384 = vcmask 31744
        %v386 = vsel %vm384, %v382, 0
        %vm388 = vcmask 1043456
        %v390 = vsel %vm388, %v383, 0
        %392 = vmatprep.subr.mxu0 0.0
        %393 = vmatpush1.msra.mxu0 %v390
        %394 = vmatprep.subr.mxu0 0.0
        %395 = vmatpush1.msra.mxu0 0.0
        %396 = vmatprep.subr.mxu0 0.0
        %397 = vmatpush1.msra.mxu0 0.0
        %398 = vmatprep.subr.mxu0 0.0
        %399 = vmatpush1.msra.mxu0 0.0
        %400 = vmatprep.subr.mxu0 0.0
        %401 = vmatpush1.msra.mxu0 0.0
        %402 = vmatprep.subr.mxu0 0.0
        %403 = vmatpush1.msra.mxu0 0.0
        %404 = vmatprep.subr.mxu0 0.0
        %405 = vmatpush1.msra.mxu0 0.0
        %406 = vmatprep.subr.mxu0 0.0
        %407 = vmatpush1.msra.mxu0 0.0
        %408 = vmatprep.subr.mxu0 0.0
        %409 = vmatpush1.msra.mxu0 0.0
        %410 = vmatprep.subr.mxu0 0.0
        %411 = vmatpush1.msra.mxu0 0.0
        %412 = vmatprep.subr.mxu0 0.0
        %413 = vmatpush1.msra.mxu0 0.0
        %414 = vmatprep.subr.mxu0 0.0
        %415 = vmatpush1.msra.mxu0 0.0
        %416 = vmatprep.subr.mxu0 0.0
        %417 = vmatpush1.msra.mxu0 0.0
        %418 = vmatprep.subr.mxu0 0.0
        %419 = vmatpush1.msra.mxu0 0.0
        %420 = vmatprep.subr.mxu0 0.0
        %421 = vmatpush1.msra.mxu0 0.0
        %422 = vmatprep.subr.mxu0 0.0
        %423 = vmatpush1.msra.mxu0 0.0
        %424 = vmatprep.subr.mxu0 0.0
        %425 = vmatpush1.msra.mxu0 0.0
        %426 = vmatprep.subr.mxu0 0.0
        %427 = vmatpush1.msra.mxu0 0.0
        %428 = vmatprep.subr.mxu0 0.0
        %429 = vmatpush1.msra.mxu0 0.0
        %430 = vmatprep.subr.mxu0 0.0
        %431 = vmatpush1.msra.mxu0 0.0
        %432 = vmatprep.subr.mxu0 0.0
        %433 = vmatpush1.msra.mxu0 0.0
        %434 = vmatprep.subr.mxu0 0.0
        %435 = vmatpush1.msra.mxu0 0.0
        %436 = vmatprep.subr.mxu0 0.0
        %437 = vmatpush1.msra.mxu0 0.0
        %438 = vmatprep.subr.mxu0 0.0
        %439 = vmatpush1.msra.mxu0 0.0
        %440 = vmatprep.subr.mxu0 0.0
        %441 = vmatpush1.msra.mxu0 0.0
        %442 = vmatprep.subr.mxu0 0.0
        %443 = vmatpush1.msra.mxu0 0.0
        %444 = vmatprep.subr.mxu0 0.0
        %445 = vmatpush1.msra.mxu0 0.0
        %446 = vmatprep.subr.mxu0 0.0
        %447 = vmatpush1.msra.mxu0 0.0
        %448 = vmatprep.subr.mxu0 0.0
        %449 = vmatpush1.msra.mxu0 0.0
        %450 = vmatprep.subr.mxu0 0.0
        %451 = vmatpush1.msra.mxu0 0.0
        %452 = vmatprep.subr.mxu0 0.0
        %453 = vmatpush1.msra.mxu0 0.0
        %454 = vmatprep.subr.mxu0 0.0
        %455 = vmatpush1.msra.mxu0 0.0
        %456 = vmatprep.mubr.f32.mxu0 0.0
        %457 = vmatmul.mubr.f32.gmra.mrb[0].mxu0 %v386
        %v458 = vpop.f32.mrb[0].mxu0
        %v459 = vadd.f32 0.0, %v458
        %v460 = vpop.f32.mrb[0].mxu0
        %461 = vdwg.mxu0
        %v462 = vld [vmem:[%s2] sm:$0x1]
        %v464 = vlaneseq
        %v465 = vshrl.u32 %v464, 7
        %v466 = vsub.s32 0, %v465
        %v467 = vrot.slane %v462, %v466
        %v469 = vsub.f32 %v459, %v467
        %v470 = vmax.f32 %v469, 0.0
        %v471 = vld [vmem:[%s3] sm:$0x1]
        %v473 = vlaneseq
        %v474 = vshrl.u32 %v473, 7
        %v475 = vsub.s32 0, %v474
        %v476 = vrot.slane %v471, %v475
        %v478 = vsub.f32 %v476, %v459
        %v479 = vmax.f32 %v478, 0.0
        %v480 = vmul.f32 %v470, %v479
        %v481 = vmul.f32 %v480, %v480
        %v482 = vld [vmem:[%s4] sm:$0xff]
        %v483 = vld [vmem:[%s4 + $0x8] sm:$0xff]
        %v484 = vld [vmem:[%s4 + $0x10] sm:$0xff]
        %v485 = vld [vmem:[%s4 + $0x18] sm:$0xff]
        %v486 = vld [vmem:[%s5] sm:$0x1]
        %v488 = vlaneseq
        %v489 = vshrl.u32 %v488, 7
        %v490 = vsub.s32 0, %v489
        %v491 = vrot.slane %v486, %v490
        %vm493 = vcmask 261120
        %v495 = vsel %vm493, %v481, 0
        %497 = vmatprep.subr.mxu0 0.0
        %498 = vmatpush1.msra.mxu0 %v482
        %499 = vmatprep.subr.mxu0 0.0
        %500 = vmatpush1.msra.mxu0 %v483
        %501 = vmatprep.subr.mxu0 0.0
        %502 = vmatpush1.msra.mxu0 %v484
        %503 = vmatprep.subr.mxu0 0.0
        %504 = vmatpush1.msra.mxu0 %v485
        %505 = vmatprep.subr.mxu0 0.0
        %506 = vmatpush1.msra.mxu0 0.0
        %507 = vmatprep.subr.mxu0 0.0
        %508 = vmatpush1.msra.mxu0 0.0
        %509 = vmatprep.subr.mxu0 0.0
        %510 = vmatpush1.msra.mxu0 0.0
        %511 = vmatprep.subr.mxu0 0.0
        %512 = vmatpush1.msra.mxu0 0.0
        %513 = vmatprep.subr.mxu0 0.0
        %514 = vmatpush1.msra.mxu0 0.0
        %515 = vmatprep.subr.mxu0 0.0
        %516 = vmatpush1.msra.mxu0 0.0
        %517 = vmatprep.subr.mxu0 0.0
        %518 = vmatpush1.msra.mxu0 0.0
        %519 = vmatprep.subr.mxu0 0.0
        %520 = vmatpush1.msra.mxu0 0.0
        %521 = vmatprep.subr.mxu0 0.0
        %522 = vmatpush1.msra.mxu0 0.0
        %523 = vmatprep.subr.mxu0 0.0
        %524 = vmatpush1.msra.mxu0 0.0
        %525 = vmatprep.subr.mxu0 0.0
        %526 = vmatpush1.msra.mxu0 0.0
        %527 = vmatprep.subr.mxu0 0.0
        %528 = vmatpush1.msra.mxu0 0.0
        %529 = vmatprep.subr.mxu0 0.0
        %530 = vmatpush1.msra.mxu0 0.0
        %531 = vmatprep.subr.mxu0 0.0
        %532 = vmatpush1.msra.mxu0 0.0
        %533 = vmatprep.subr.mxu0 0.0
        %534 = vmatpush1.msra.mxu0 0.0
        %535 = vmatprep.subr.mxu0 0.0
        %536 = vmatpush1.msra.mxu0 0.0
        %537 = vmatprep.subr.mxu0 0.0
        %538 = vmatpush1.msra.mxu0 0.0
        %539 = vmatprep.subr.mxu0 0.0
        %540 = vmatpush1.msra.mxu0 0.0
        %541 = vmatprep.subr.mxu0 0.0
        %542 = vmatpush1.msra.mxu0 0.0
        %543 = vmatprep.subr.mxu0 0.0
        %544 = vmatpush1.msra.mxu0 0.0
        %545 = vmatprep.subr.mxu0 0.0
        %546 = vmatpush1.msra.mxu0 0.0
        %547 = vmatprep.subr.mxu0 0.0
        %548 = vmatpush1.msra.mxu0 0.0
        %549 = vmatprep.subr.mxu0 0.0
        %550 = vmatpush1.msra.mxu0 0.0
        %551 = vmatprep.subr.mxu0 0.0
        %552 = vmatpush1.msra.mxu0 0.0
        %553 = vmatprep.subr.mxu0 0.0
        %554 = vmatpush1.msra.mxu0 0.0
        %555 = vmatprep.subr.mxu0 0.0
        %556 = vmatpush1.msra.mxu0 0.0
        %557 = vmatprep.subr.mxu0 0.0
        %558 = vmatpush1.msra.mxu0 0.0
        %559 = vmatprep.subr.mxu0 0.0
        %560 = vmatpush1.msra.mxu0 0.0
        %561 = vmatprep.mubr.f32.mxu0 0.0
        %562 = vmatmul.mubr.f32.gmra.mrb[0].mxu0 %v495
        %v563 = vpop.f32.mrb[0].mxu0
        %v564 = vadd.f32 %v491, %v563
        %v565 = vpop.f32.mrb[0].mxu0
        %566 = vdwg.mxu0
        %v567 = vld [vmem:[%s6] sm:$0xff]
        %v568 = vld [vmem:[%s6 + $0x8] sm:$0xff]
        %v569 = vld [vmem:[%s6 + $0x10] sm:$0xff]
        %v570 = vld [vmem:[%s6 + $0x18] sm:$0xff]
        %v571 = vld [vmem:[%s6 + $0x20] sm:$0xff]
        %v572 = vld [vmem:[%s6 + $0x28] sm:$0xff]
        %v573 = vld [vmem:[%s6 + $0x30] sm:$0xff]
        %v574 = vld [vmem:[%s6 + $0x38] sm:$0xff]
        %v575 = vld [vmem:[%s6 + $0x40] sm:$0xff]
        %v576 = vld [vmem:[%s6 + $0x48] sm:$0xff]
        %v577 = vld [vmem:[%s6 + $0x50] sm:$0xff]
        %v578 = vld [vmem:[%s6 + $0x58] sm:$0xff]
        %v579 = vld [vmem:[%s6 + $0x60] sm:$0xff]
        %v580 = vld [vmem:[%s6 + $0x68] sm:$0xff]
        %v581 = vld [vmem:[%s6 + $0x70] sm:$0xff]
        %v582 = vld [vmem:[%s6 + $0x78] sm:$0xff]
        %583 = vmatprep.subr.mxu0 0.0
        %584 = vmatpush1.msra.mxu0 %v567
        %585 = vmatprep.subr.mxu0 0.0
        %586 = vmatpush1.msra.mxu0 %v568
        %587 = vmatprep.subr.mxu0 0.0
        %588 = vmatpush1.msra.mxu0 %v569
        %589 = vmatprep.subr.mxu0 0.0
        %590 = vmatpush1.msra.mxu0 %v570
        %591 = vmatprep.subr.mxu0 0.0
        %592 = vmatpush1.msra.mxu0 %v571
        %593 = vmatprep.subr.mxu0 0.0
        %594 = vmatpush1.msra.mxu0 %v572
        %595 = vmatprep.subr.mxu0 0.0
        %596 = vmatpush1.msra.mxu0 %v573
        %597 = vmatprep.subr.mxu0 0.0
        %598 = vmatpush1.msra.mxu0 %v574
        %599 = vmatprep.subr.mxu0 0.0
        %600 = vmatpush1.msra.mxu0 %v575
        %601 = vmatprep.subr.mxu0 0.0
        %602 = vmatpush1.msra.mxu0 %v576
        %603 = vmatprep.subr.mxu0 0.0
        %604 = vmatpush1.msra.mxu0 %v577
        %605 = vmatprep.subr.mxu0 0.0
        %606 = vmatpush1.msra.mxu0 %v578
        %607 = vmatprep.subr.mxu0 0.0
        %608 = vmatpush1.msra.mxu0 %v579
        %609 = vmatprep.subr.mxu0 0.0
        %610 = vmatpush1.msra.mxu0 %v580
        %611 = vmatprep.subr.mxu0 0.0
        %612 = vmatpush1.msra.mxu0 %v581
        %613 = vmatprep.subr.mxu0 0.0
        %614 = vmatpush1.msra.mxu0 %v582
        %615 = vmatprep.subr.mxu0 0.0
        %616 = vmatpush1.msra.mxu0 0.0
        %617 = vmatprep.subr.mxu0 0.0
        %618 = vmatpush1.msra.mxu0 0.0
        %619 = vmatprep.subr.mxu0 0.0
        %620 = vmatpush1.msra.mxu0 0.0
        %621 = vmatprep.subr.mxu0 0.0
        %622 = vmatpush1.msra.mxu0 0.0
        %623 = vmatprep.subr.mxu0 0.0
        %624 = vmatpush1.msra.mxu0 0.0
        %625 = vmatprep.subr.mxu0 0.0
        %626 = vmatpush1.msra.mxu0 0.0
        %627 = vmatprep.subr.mxu0 0.0
        %628 = vmatpush1.msra.mxu0 0.0
        %629 = vmatprep.subr.mxu0 0.0
        %630 = vmatpush1.msra.mxu0 0.0
        %631 = vmatprep.subr.mxu0 0.0
        %632 = vmatpush1.msra.mxu0 0.0
        %633 = vmatprep.subr.mxu0 0.0
        %634 = vmatpush1.msra.mxu0 0.0
        %635 = vmatprep.subr.mxu0 0.0
        %636 = vmatpush1.msra.mxu0 0.0
        %637 = vmatprep.subr.mxu0 0.0
        %638 = vmatpush1.msra.mxu0 0.0
        %639 = vmatprep.subr.mxu0 0.0
        %640 = vmatpush1.msra.mxu0 0.0
        %641 = vmatprep.subr.mxu0 0.0
        %642 = vmatpush1.msra.mxu0 0.0
        %643 = vmatprep.subr.mxu0 0.0
        %644 = vmatpush1.msra.mxu0 0.0
        %645 = vmatprep.subr.mxu0 0.0
        %646 = vmatpush1.msra.mxu0 0.0
        %647 = vmatprep.mubr.f32.mxu0 0.0
        %648 = vmatmul.mubr.f32.gmra.mrb[0].mxu0 %v564
        %v649 = vpop.f32.mrb[0].mxu0
        %v650 = vadd.f32 0.0, %v649
        %v651 = vpop.f32.mrb[0].mxu0
        %652 = vdwg.mxu0
        %v653 = vld [vmem:[%s7] sm:$0x1]
        %v655 = vlaneseq
        %v656 = vshrl.u32 %v655, 7
        %v657 = vsub.s32 0, %v656
        %v658 = vrot.slane %v653, %v657
        %v660 = vsub.f32 %v650, %v658
        %v661 = vmax.f32 %v660, 0.0
        %v662 = vld [vmem:[%s8] sm:$0x1]
        %v664 = vlaneseq
        %v665 = vshrl.u32 %v664, 7
        %v666 = vsub.s32 0, %v665
        %v667 = vrot.slane %v662, %v666
        %v669 = vsub.f32 %v667, %v650
        %v670 = vmax.f32 %v669, 0.0
        %v671 = vmul.f32 %v661, %v670
        %v672 = vmul.f32 %v671, %v671
        %v673 = vld [vmem:[%s9] sm:$0xff]
        %v674 = vld [vmem:[%s9 + $0x8] sm:$0xff]
        %v675 = vld [vmem:[%s9 + $0x10] sm:$0xff]
        %v676 = vld [vmem:[%s9 + $0x18] sm:$0xff]
        %v677 = vld [vmem:[%s9 + $0x20] sm:$0xff]
        %v678 = vld [vmem:[%s9 + $0x28] sm:$0xff]
        %v679 = vld [vmem:[%s9 + $0x30] sm:$0xff]
        %v680 = vld [vmem:[%s9 + $0x38] sm:$0xff]
        %v681 = vld [vmem:[%s10] sm:$0x1]
        %v683 = vlaneseq
        %v684 = vshrl.u32 %v683, 7
        %v685 = vsub.s32 0, %v684
        %v686 = vrot.slane %v681, %v685
        %vm688 = vcmask 523264
        %v690 = vsel %vm688, %v672, 0
        %692 = vmatprep.subr.mxu0 0.0
        %693 = vmatpush1.msra.mxu0 %v673
        %694 = vmatprep.subr.mxu0 0.0
        %695 = vmatpush1.msra.mxu0 %v674
        %696 = vmatprep.subr.mxu0 0.0
        %697 = vmatpush1.msra.mxu0 %v675
        %698 = vmatprep.subr.mxu0 0.0
        %699 = vmatpush1.msra.mxu0 %v676
        %700 = vmatprep.subr.mxu0 0.0
        %701 = vmatpush1.msra.mxu0 %v677
        %702 = vmatprep.subr.mxu0 0.0
        %703 = vmatpush1.msra.mxu0 %v678
        %704 = vmatprep.subr.mxu0 0.0
        %705 = vmatpush1.msra.mxu0 %v679
        %706 = vmatprep.subr.mxu0 0.0
        %707 = vmatpush1.msra.mxu0 %v680
        %708 = vmatprep.subr.mxu0 0.0
        %709 = vmatpush1.msra.mxu0 0.0
        %710 = vmatprep.subr.mxu0 0.0
        %711 = vmatpush1.msra.mxu0 0.0
        %712 = vmatprep.subr.mxu0 0.0
        %713 = vmatpush1.msra.mxu0 0.0
        %714 = vmatprep.subr.mxu0 0.0
        %715 = vmatpush1.msra.mxu0 0.0
        %716 = vmatprep.subr.mxu0 0.0
        %717 = vmatpush1.msra.mxu0 0.0
        %718 = vmatprep.subr.mxu0 0.0
        %719 = vmatpush1.msra.mxu0 0.0
        %720 = vmatprep.subr.mxu0 0.0
        %721 = vmatpush1.msra.mxu0 0.0
        %722 = vmatprep.subr.mxu0 0.0
        %723 = vmatpush1.msra.mxu0 0.0
        %724 = vmatprep.subr.mxu0 0.0
        %725 = vmatpush1.msra.mxu0 0.0
        %726 = vmatprep.subr.mxu0 0.0
        %727 = vmatpush1.msra.mxu0 0.0
        %728 = vmatprep.subr.mxu0 0.0
        %729 = vmatpush1.msra.mxu0 0.0
        %730 = vmatprep.subr.mxu0 0.0
        %731 = vmatpush1.msra.mxu0 0.0
        %732 = vmatprep.subr.mxu0 0.0
        %733 = vmatpush1.msra.mxu0 0.0
        %734 = vmatprep.subr.mxu0 0.0
        %735 = vmatpush1.msra.mxu0 0.0
        %736 = vmatprep.subr.mxu0 0.0
        %737 = vmatpush1.msra.mxu0 0.0
        %738 = vmatprep.subr.mxu0 0.0
        %739 = vmatpush1.msra.mxu0 0.0
        %740 = vmatprep.subr.mxu0 0.0
        %741 = vmatpush1.msra.mxu0 0.0
        %742 = vmatprep.subr.mxu0 0.0
        %743 = vmatpush1.msra.mxu0 0.0
        %744 = vmatprep.subr.mxu0 0.0
        %745 = vmatpush1.msra.mxu0 0.0
        %746 = vmatprep.subr.mxu0 0.0
        %747 = vmatpush1.msra.mxu0 0.0
        %748 = vmatprep.subr.mxu0 0.0
        %749 = vmatpush1.msra.mxu0 0.0
        %750 = vmatprep.subr.mxu0 0.0
        %751 = vmatpush1.msra.mxu0 0.0
        %752 = vmatprep.subr.mxu0 0.0
        %753 = vmatpush1.msra.mxu0 0.0
        %754 = vmatprep.subr.mxu0 0.0
        %755 = vmatpush1.msra.mxu0 0.0
        %756 = vmatprep.mubr.f32.mxu0 0.0
        %757 = vmatmul.mubr.f32.gmra.mrb[0].mxu0 %v690
        %v758 = vpop.f32.mrb[0].mxu0
        %v759 = vadd.f32 %v686, %v758
        %v760 = vpop.f32.mrb[0].mxu0
        %761 = vdwg.mxu0
        %762 = vst [vmem:[%s377] sm:$0xff] %v759
        %s763 = sand.u32 %s269, 1
        %s764 = scalar_lea.sflag [#allocation3], %s763
        %s765 = sand.u32 %s269, 1
        %s766 = smul.addr %s765, 8
        %s767 = scalar_lea.vmem [#allocation2], %s766
        // Predicated region
        $region65: #{tpu_custom_call.1} parent=63 // pred_check
          %p768 = pneg %p279
        $region66: #{tpu_custom_call.1} parent=63 // pred_check_branch
          %770 = sbr.rel (%p768) target = $region68
        $region67: #{tpu_custom_call.1} parent=63 // pred_region
          %s772 = ssub.s32 128, 128
          %773 = vsyncadd %s764, %s772
          %s774 = smul.addr %s25, 128
          %s775 = scalar_lea.hbm %s11, %s774
          %s777 = sshll.u32 %s767, 4
          %s778 = int_to_ptr.vmem [resolvable:$true] %s777
          %780 = dma.vmem_to_hbm [thread:$0]  %s778, 128, %s775, %s764
        $region68: #{tpu_custom_call.1} parent=63 // pred_fallthru
          _
      $region64: #{tpu_custom_call.1} parent=5 // pred_fallthru
        _
      %p781 = scmp.le.s32.totalorder 2, %s20
      // Predicated region
      $region69: #{tpu_custom_call.1} parent=5 // pred_check
        %p782 = pneg %p781
      $region70: #{tpu_custom_call.1} parent=5 // pred_check_branch
        %784 = sbr.rel (%p782) target = $region72
      $region71: #{tpu_custom_call.1} parent=5 // pred_region
        %s785 = ssub.s32 %s20, 2
        // Predicated region
        $region73: #{tpu_custom_call.1} parent=71 // pred_check
          %p786 = pneg %p285
        $region74: #{tpu_custom_call.1} parent=71 // pred_check_branch
          %788 = sbr.rel (%p786) target = $region76
        $region75: #{tpu_custom_call.1} parent=71 // pred_region
          %s789 = sand.u32 %s270, 1
          %s790 = scalar_lea.sflag [#allocation3], %s789
          %s791 = sand.u32 %s270, 1
          %s792 = smul.addr %s791, 8
          %s793 = scalar_lea.vmem [#allocation2], %s792
          %794 = dma.done %s790, 128
        $region76: #{tpu_custom_call.1} parent=71 // pred_fallthru
          _
      $region72: #{tpu_custom_call.1} parent=5 // pred_fallthru
        _
    $region6: #{tpu_custom_call.1} parent=1 // loop_footer
      %s24 = sadd.s32 1, %s20
    $region7: #{tpu_custom_call.1} parent=1 // loop_footer_branch
      %19 = sbr.rel target = $region3
    $region8: #{tpu_custom_call.1} parent=1 // loop_exit
      _
    %795 = vsyncpa [#allocation3], 1
    %s796 = scalar_lea.sflag [#allocation3], 1
    %797 = vsyncpa %s796, 1

</llo_original>
